<compile_context>
chip_gen: v7x
topology: tpu7x:2x2x1
jax: 0.10.0
libtpu: 0.0.40
codegen_flags: <defaults>
</compile_context>

<pallas_src>
import functools

import jax
import jax.numpy as jnp
from jax import lax
from jax.experimental import pallas as pl
from jax.experimental.pallas import tpu as pltpu

_LANES = 128


def _focal_ce_kernel(w_ref, pred_ref, tgt_ref, out_ref, *, gamma, num_classes):
    """Accumulate per-pixel focal / weighted-NLL / weight partials into out_ref.

    w_ref    : (C,)              f32 class weights in SMEM (scalar prefetch)
    pred_ref : (1, C, TR, 128)   logits tile (input dtype, cast to f32 in-kernel)
    tgt_ref  : (1, 1, TR, 128)   i32 labels tile (-1 on padded pixels)
    out_ref  : (3, TR, 128)      f32 accumulator: [0]=focal, [1]=w*nll, [2]=w
    """
    b = pl.program_id(0)
    s = pl.program_id(1)

    @pl.when((b == 0) & (s == 0))
    def _():
        out_ref[...] = jnp.zeros_like(out_ref)

    tgt = tgt_ref[0, 0]                      # (TR, 128) int32
    valid = tgt >= 0                         # padded pixels -> False

    # Numerically stable log-softmax over the class axis, done as an elementwise
    # loop over C slices (spatial stays dense on sublanes/lanes).
    m = pred_ref[0, 0].astype(jnp.float32)   # (TR, 128)
    for ci in range(1, num_classes):
        m = jnp.maximum(m, pred_ref[0, ci].astype(jnp.float32))

    ssum = jnp.zeros_like(m)
    logit_t = jnp.zeros_like(m)
    w_t = jnp.zeros_like(m)
    for ci in range(num_classes):
        lc = pred_ref[0, ci].astype(jnp.float32)
        ssum = ssum + jnp.exp(lc - m)
        sel = tgt == ci
        logit_t = jnp.where(sel, lc, logit_t)
        w_t = jnp.where(sel, w_ref[ci], w_t)         # scalar SMEM read, broadcast

    logpt = logit_t - m - jnp.log(ssum)              # (TR, 128) log p_t
    pt = jnp.exp(logpt)
    omp = jnp.maximum(1.0 - pt, 0.0)                 # clamp: no NaN if pt rounds > 1

    g = float(gamma)
    if g == 2.0:
        focal_term = omp * omp                       # VPU square, not EUP pow
    elif g == float(int(g)) and g >= 1.0:
        focal_term = lax.integer_pow(omp, int(g))
    else:
        focal_term = jnp.power(omp, g)

    zero = jnp.zeros_like(logpt)
    focal = jnp.where(valid, -(focal_term * logpt), zero)
    w_t = jnp.where(valid, w_t, zero)
    ce_num = jnp.where(valid, -(w_t * logpt), zero)

    out_ref[0] += focal
    out_ref[1] += ce_num
    out_ref[2] += w_t


def focal_with_ce(pred_nchw, target_nhw, class_weights, focal_weight, ce_weight,
                  *, gamma=2.0, max_tile_rows=512):
    n, c, h, w_ = pred_nchw.shape
    hw = h * w_

    # Spatial axis split into (rows, 128 lanes); pick the tile row count so the
    # double-buffered pred block stays around 1-2 MiB (amortizes grid-step overhead,
    # fits scoped VMEM on v5e/v6e/v7x).
    s_rows = pl.cdiv(hw, _LANES)
    target_block_bytes = 2 * 1024 * 1024
    tr = max(8, target_block_bytes // (c * _LANES * 4))
    tr = min(tr, max_tile_rows)
    tr = max(8, (tr // 8) * 8)
    if s_rows <= tr:
        tr = s_rows
        s_rows_pad = s_rows
    else:
        s_rows_pad = pl.cdiv(s_rows, tr) * tr
    hw_pad = s_rows_pad * _LANES

    # Contiguous reshapes only (no transpose, no dtype up-cast of the logits in HBM).
    pred = pred_nchw.reshape(n, c, hw)
    tgt = target_nhw.reshape(n, 1, hw).astype(jnp.int32)
    if hw_pad != hw:
        pred = jnp.pad(pred, ((0, 0), (0, 0), (0, hw_pad - hw)))
        tgt = jnp.pad(tgt, ((0, 0), (0, 0), (0, hw_pad - hw)), constant_values=-1)
    pred = pred.reshape(n, c, s_rows_pad, _LANES)
    tgt = tgt.reshape(n, 1, s_rows_pad, _LANES)

    cw = jnp.asarray(class_weights, jnp.float32).reshape(c)

    grid = (n, s_rows_pad // tr)
    # TODO(synk): on v7x one could add a leading 'parallel' axis with per-core accumulator
    # rows to use both TensorCores; single-core reduction kept here for simplicity.
    sums = pl.pallas_call(
        functools.partial(_focal_ce_kernel, gamma=gamma, num_classes=c),
        out_shape=jax.ShapeDtypeStruct((3, tr, _LANES), jnp.float32),
        grid_spec=pltpu.PrefetchScalarGridSpec(
            num_scalar_prefetch=1,
            grid=grid,
            in_specs=[
                pl.BlockSpec((1, c, tr, _LANES), lambda b, s, wref: (b, 0, s, 0)),
                pl.BlockSpec((1, 1, tr, _LANES), lambda b, s, wref: (b, 0, s, 0)),
            ],
            out_specs=pl.BlockSpec((3, tr, _LANES), lambda b, s, wref: (0, 0, 0)),
        ),
        compiler_params=pltpu.CompilerParams(
            dimension_semantics=("arbitrary", "arbitrary")),
    )(cw, pred, tgt)

    focal_sum = jnp.sum(sums[0])
    ce_num = jnp.sum(sums[1])
    ce_den = jnp.sum(sums[2])

    focal_mean = focal_sum / jnp.float32(n * hw)     # FocalLoss reduction='mean' over all pixels
    ce = ce_num / ce_den                             # nn.CrossEntropyLoss weighted mean
    return jnp.float32(focal_weight) * focal_mean + jnp.float32(ce_weight) * ce


def _reference_loss(pred_nchw, target, class_weights, focal_weight, ce_weight, gamma=2.0):
    """Pure-JAX reference mirroring the PyTorch semantics."""
    c = pred_nchw.shape[1]
    logp = jax.nn.log_softmax(pred_nchw.astype(jnp.float32), axis=1)   # (N,C,H,W)
    oh = jax.nn.one_hot(target, c, axis=1, dtype=jnp.float32)          # (N,C,H,W)
    logpt = jnp.sum(logp * oh, axis=1)                                 # (N,H,W)
    pt = jnp.exp(logpt)
    focal = jnp.mean(-((1.0 - pt) ** gamma) * logpt)
    w = jnp.asarray(class_weights, jnp.float32)[target]                # (N,H,W)
    ce = jnp.sum(-w * logpt) / jnp.sum(w)
    return focal_weight * focal + ce_weight * ce


if __name__ == "__main__":
    key = jax.random.PRNGKey(0)
    k_pred, k_tgt = jax.random.split(key)

    N, C, H, W = 2, 4, 16, 16
    pred = jax.random.normal(k_pred, (N, C, H, W), dtype=jnp.float32)
    target = jax.random.randint(k_tgt, (N, H, W), 0, C, dtype=jnp.int32)

    # deterministic "module params"
    class_weights = [1.0, 2.0, 0.5, 1.5]
    focal_weight = 1.0
    ce_weight = 0.5

    loss = focal_with_ce(pred, target, class_weights, focal_weight, ce_weight)
    loss = jax.block_until_ready(loss)

    ref = jax.block_until_ready(
        _reference_loss(pred, target, class_weights, focal_weight, ce_weight))
    assert jnp.allclose(loss, ref, rtol=1e-5, atol=1e-5), (loss, ref)

    print("KERNEL_OK")
</pallas_src>

<mosaic_0001>
module attributes {stable_mosaic.version = 11 : i64} {
  func.func @_focal_ce_kernel(%arg0: i32, %arg1: i32, %arg2: memref<4xf32, #tpu.memory_space<smem>>, %arg3: memref<1x4x2x128xf32, #tpu.memory_space<vmem>>, %arg4: memref<1x1x2x128xi32, #tpu.memory_space<vmem>>, %arg5: memref<3x2x128xf32, #tpu.memory_space<vmem>>) attributes {dimension_semantics = [#tpu.dimension_semantics<arbitrary>, #tpu.dimension_semantics<arbitrary>], iteration_bounds = array<i64: 2, 1>, scalar_prefetch = 1 : i64, scratch_operands = 0 : i64, tpu.core_type = #tpu.core_type<tc>, window_params = [{transform_indices = @transform_0, window_bounds = array<i64: 1, 4, 2, 128>}, {transform_indices = @transform_1, window_bounds = array<i64: 1, 1, 2, 128>}, {pipeline_mode = #tpu.pipeline_mode<synchronous>, transform_indices = @transform_2, window_bounds = array<i64: 3, 2, 128>}]} {
    %c0_i32 = arith.constant 0 : i32
    %0 = arith.cmpi eq, %arg0, %c0_i32 : i32
    %c0_i32_0 = arith.constant 0 : i32
    %1 = arith.cmpi eq, %arg1, %c0_i32_0 : i32
    %2 = arith.andi %0, %1 : i1
    %3 = arith.extui %2 : i1 to i32
    %c0_i32_1 = arith.constant 0 : i32
    %4 = arith.cmpi ne, %3, %c0_i32_1 : i32
    scf.if %4 {
      %cst_65 = arith.constant 0.000000e+00 : f32
      %104 = vector.broadcast %cst_65 : f32 to vector<3x2x128xf32>
      %c0_66 = arith.constant 0 : index
      %c0_67 = arith.constant 0 : index
      %c0_68 = arith.constant 0 : index
      %105 = vector.load %arg5[%c0_66, %c0_67, %c0_68] : memref<3x2x128xf32, #tpu.memory_space<vmem>>, vector<3x2x128xf32>
      tpu.vector_store %arg5[%c0_66, %c0_67, %c0_68], %104 {strides = array<i32>} : memref<3x2x128xf32, #tpu.memory_space<vmem>>, vector<3x2x128xf32>,
    } else {
    }
    %c0 = arith.constant 0 : index
    %c0_2 = arith.constant 0 : index
    %c0_3 = arith.constant 0 : index
    %c0_4 = arith.constant 0 : index
    %5 = vector.load %arg4[%c0, %c0_2, %c0_3, %c0_4] : memref<1x1x2x128xi32, #tpu.memory_space<vmem>>, vector<1x1x2x128xi32>
    %6 = vector.shape_cast %5 : vector<1x1x2x128xi32> to vector<2x128xi32>
    %c0_i32_5 = arith.constant 0 : i32
    %7 = vector.broadcast %c0_i32_5 : i32 to vector<2x128xi32>
    %8 = arith.cmpi sge, %6, %7 : vector<2x128xi32>
    %c0_6 = arith.constant 0 : index
    %c0_7 = arith.constant 0 : index
    %c0_8 = arith.constant 0 : index
    %c0_9 = arith.constant 0 : index
    %9 = vector.load %arg3[%c0_6, %c0_7, %c0_8, %c0_9] : memref<1x4x2x128xf32, #tpu.memory_space<vmem>>, vector<1x1x2x128xf32>
    %10 = vector.shape_cast %9 : vector<1x1x2x128xf32> to vector<2x128xf32>
    %c0_10 = arith.constant 0 : index
    %c1 = arith.constant 1 : index
    %c0_11 = arith.constant 0 : index
    %c0_12 = arith.constant 0 : index
    %11 = vector.load %arg3[%c0_10, %c1, %c0_11, %c0_12] : memref<1x4x2x128xf32, #tpu.memory_space<vmem>>, vector<1x1x2x128xf32>
    %12 = vector.shape_cast %11 : vector<1x1x2x128xf32> to vector<2x128xf32>
    %13 = arith.maximumf %10, %12 : vector<2x128xf32>
    %c0_13 = arith.constant 0 : index
    %c2 = arith.constant 2 : index
    %c0_14 = arith.constant 0 : index
    %c0_15 = arith.constant 0 : index
    %14 = vector.load %arg3[%c0_13, %c2, %c0_14, %c0_15] : memref<1x4x2x128xf32, #tpu.memory_space<vmem>>, vector<1x1x2x128xf32>
    %15 = vector.shape_cast %14 : vector<1x1x2x128xf32> to vector<2x128xf32>
    %16 = arith.maximumf %13, %15 : vector<2x128xf32>
    %c0_16 = arith.constant 0 : index
    %c3 = arith.constant 3 : index
    %c0_17 = arith.constant 0 : index
    %c0_18 = arith.constant 0 : index
    %17 = vector.load %arg3[%c0_16, %c3, %c0_17, %c0_18] : memref<1x4x2x128xf32, #tpu.memory_space<vmem>>, vector<1x1x2x128xf32>
    %18 = vector.shape_cast %17 : vector<1x1x2x128xf32> to vector<2x128xf32>
    %19 = arith.maximumf %16, %18 : vector<2x128xf32>
    %cst = arith.constant 0.000000e+00 : f32
    %20 = vector.broadcast %cst : f32 to vector<2x128xf32>
    %cst_19 = arith.constant 0.000000e+00 : f32
    %21 = vector.broadcast %cst_19 : f32 to vector<2x128xf32>
    %cst_20 = arith.constant 0.000000e+00 : f32
    %22 = vector.broadcast %cst_20 : f32 to vector<2x128xf32>
    %c0_21 = arith.constant 0 : index
    %c0_22 = arith.constant 0 : index
    %c0_23 = arith.constant 0 : index
    %c0_24 = arith.constant 0 : index
    %23 = vector.load %arg3[%c0_21, %c0_22, %c0_23, %c0_24] : memref<1x4x2x128xf32, #tpu.memory_space<vmem>>, vector<1x1x2x128xf32>
    %24 = vector.shape_cast %23 : vector<1x1x2x128xf32> to vector<2x128xf32>
    %25 = arith.subf %24, %19 : vector<2x128xf32>
    %26 = math.exp %25 : vector<2x128xf32>
    %27 = arith.addf %20, %26 : vector<2x128xf32>
    %c0_i32_25 = arith.constant 0 : i32
    %28 = vector.broadcast %c0_i32_25 : i32 to vector<2x128xi32>
    %29 = arith.cmpi eq, %6, %28 : vector<2x128xi32>
    %30 = arith.select %29, %24, %21 : vector<2x128xi1>, vector<2x128xf32>
    %c0_26 = arith.constant 0 : index
    %31 = memref.load %arg2[%c0_26] : memref<4xf32, #tpu.memory_space<smem>>
    %32 = vector.broadcast %31 : f32 to vector<2x128xf32>
    %33 = arith.select %29, %32, %22 : vector<2x128xi1>, vector<2x128xf32>
    %c0_27 = arith.constant 0 : index
    %c1_28 = arith.constant 1 : index
    %c0_29 = arith.constant 0 : index
    %c0_30 = arith.constant 0 : index
    %34 = vector.load %arg3[%c0_27, %c1_28, %c0_29, %c0_30] : memref<1x4x2x128xf32, #tpu.memory_space<vmem>>, vector<1x1x2x128xf32>
    %35 = vector.shape_cast %34 : vector<1x1x2x128xf32> to vector<2x128xf32>
    %36 = arith.subf %35, %19 : vector<2x128xf32>
    %37 = math.exp %36 : vector<2x128xf32>
    %38 = arith.addf %27, %37 : vector<2x128xf32>
    %c1_i32 = arith.constant 1 : i32
    %39 = vector.broadcast %c1_i32 : i32 to vector<2x128xi32>
    %40 = arith.cmpi eq, %6, %39 : vector<2x128xi32>
    %41 = arith.select %40, %35, %30 : vector<2x128xi1>, vector<2x128xf32>
    %c1_31 = arith.constant 1 : index
    %42 = memref.load %arg2[%c1_31] : memref<4xf32, #tpu.memory_space<smem>>
    %43 = vector.broadcast %42 : f32 to vector<2x128xf32>
    %44 = arith.select %40, %43, %33 : vector<2x128xi1>, vector<2x128xf32>
    %c0_32 = arith.constant 0 : index
    %c2_33 = arith.constant 2 : index
    %c0_34 = arith.constant 0 : index
    %c0_35 = arith.constant 0 : index
    %45 = vector.load %arg3[%c0_32, %c2_33, %c0_34, %c0_35] : memref<1x4x2x128xf32, #tpu.memory_space<vmem>>, vector<1x1x2x128xf32>
    %46 = vector.shape_cast %45 : vector<1x1x2x128xf32> to vector<2x128xf32>
    %47 = arith.subf %46, %19 : vector<2x128xf32>
    %48 = math.exp %47 : vector<2x128xf32>
    %49 = arith.addf %38, %48 : vector<2x128xf32>
    %c2_i32 = arith.constant 2 : i32
    %50 = vector.broadcast %c2_i32 : i32 to vector<2x128xi32>
    %51 = arith.cmpi eq, %6, %50 : vector<2x128xi32>
    %52 = arith.select %51, %46, %41 : vector<2x128xi1>, vector<2x128xf32>
    %c2_36 = arith.constant 2 : index
    %53 = memref.load %arg2[%c2_36] : memref<4xf32, #tpu.memory_space<smem>>
    %54 = vector.broadcast %53 : f32 to vector<2x128xf32>
    %55 = arith.select %51, %54, %44 : vector<2x128xi1>, vector<2x128xf32>
    %c0_37 = arith.constant 0 : index
    %c3_38 = arith.constant 3 : index
    %c0_39 = arith.constant 0 : index
    %c0_40 = arith.constant 0 : index
    %56 = vector.load %arg3[%c0_37, %c3_38, %c0_39, %c0_40] : memref<1x4x2x128xf32, #tpu.memory_space<vmem>>, vector<1x1x2x128xf32>
    %57 = vector.shape_cast %56 : vector<1x1x2x128xf32> to vector<2x128xf32>
    %58 = arith.subf %57, %19 : vector<2x128xf32>
    %59 = math.exp %58 : vector<2x128xf32>
    %60 = arith.addf %49, %59 : vector<2x128xf32>
    %c3_i32 = arith.constant 3 : i32
    %61 = vector.broadcast %c3_i32 : i32 to vector<2x128xi32>
    %62 = arith.cmpi eq, %6, %61 : vector<2x128xi32>
    %63 = arith.select %62, %57, %52 : vector<2x128xi1>, vector<2x128xf32>
    %c3_41 = arith.constant 3 : index
    %64 = memref.load %arg2[%c3_41] : memref<4xf32, #tpu.memory_space<smem>>
    %65 = vector.broadcast %64 : f32 to vector<2x128xf32>
    %66 = arith.select %62, %65, %55 : vector<2x128xi1>, vector<2x128xf32>
    %67 = arith.subf %63, %19 : vector<2x128xf32>
    %68 = math.log %60 : vector<2x128xf32>
    %69 = arith.subf %67, %68 : vector<2x128xf32>
    %70 = math.exp %69 : vector<2x128xf32>
    %cst_42 = arith.constant 1.000000e+00 : f32
    %71 = vector.broadcast %cst_42 : f32 to vector<2x128xf32>
    %72 = arith.subf %71, %70 : vector<2x128xf32>
    %cst_43 = arith.constant 0.000000e+00 : f32
    %73 = vector.broadcast %cst_43 : f32 to vector<2x128xf32>
    %74 = arith.maximumf %72, %73 : vector<2x128xf32>
    %75 = arith.mulf %74, %74 : vector<2x128xf32>
    %cst_44 = arith.constant 0.000000e+00 : f32
    %76 = vector.broadcast %cst_44 : f32 to vector<2x128xf32>
    %77 = arith.mulf %75, %69 : vector<2x128xf32>
    %cst_45 = arith.constant 0.000000e+00 : f32
    %78 = vector.broadcast %cst_45 : f32 to vector<2x128xf32>
    %79 = arith.subf %78, %77 : vector<2x128xf32>
    %80 = arith.select %8, %79, %76 : vector<2x128xi1>, vector<2x128xf32>
    %81 = arith.select %8, %66, %76 : vector<2x128xi1>, vector<2x128xf32>
    %82 = arith.mulf %81, %69 : vector<2x128xf32>
    %cst_46 = arith.constant 0.000000e+00 : f32
    %83 = vector.broadcast %cst_46 : f32 to vector<2x128xf32>
    %84 = arith.subf %83, %82 : vector<2x128xf32>
    %85 = arith.select %8, %84, %76 : vector<2x128xi1>, vector<2x128xf32>
    %c0_47 = arith.constant 0 : index
    %c0_48 = arith.constant 0 : index
    %c0_49 = arith.constant 0 : index
    %86 = vector.load %arg5[%c0_47, %c0_48, %c0_49] : memref<3x2x128xf32, #tpu.memory_space<vmem>>, vector<1x2x128xf32>
    %87 = vector.shape_cast %86 : vector<1x2x128xf32> to vector<2x128xf32>
    %88 = arith.addf %87, %80 : vector<2x128xf32>
    %c0_50 = arith.constant 0 : index
    %c0_51 = arith.constant 0 : index
    %c0_52 = arith.constant 0 : index
    %89 = vector.load %arg5[%c0_50, %c0_51, %c0_52] : memref<3x2x128xf32, #tpu.memory_space<vmem>>, vector<1x2x128xf32>
    %90 = vector.shape_cast %89 : vector<1x2x128xf32> to vector<2x128xf32>
    %91 = vector.shape_cast %88 : vector<2x128xf32> to vector<1x2x128xf32>
    tpu.vector_store %arg5[%c0_50, %c0_51, %c0_52], %91 {strides = array<i32>} : memref<3x2x128xf32, #tpu.memory_space<vmem>>, vector<1x2x128xf32>,
    %c1_53 = arith.constant 1 : index
    %c0_54 = arith.constant 0 : index
    %c0_55 = arith.constant 0 : index
    %92 = vector.load %arg5[%c1_53, %c0_54, %c0_55] : memref<3x2x128xf32, #tpu.memory_space<vmem>>, vector<1x2x128xf32>
    %93 = vector.shape_cast %92 : vector<1x2x128xf32> to vector<2x128xf32>
    %94 = arith.addf %93, %85 : vector<2x128xf32>
    %c1_56 = arith.constant 1 : index
    %c0_57 = arith.constant 0 : index
    %c0_58 = arith.constant 0 : index
    %95 = vector.load %arg5[%c1_56, %c0_57, %c0_58] : memref<3x2x128xf32, #tpu.memory_space<vmem>>, vector<1x2x128xf32>
    %96 = vector.shape_cast %95 : vector<1x2x128xf32> to vector<2x128xf32>
    %97 = vector.shape_cast %94 : vector<2x128xf32> to vector<1x2x128xf32>
    tpu.vector_store %arg5[%c1_56, %c0_57, %c0_58], %97 {strides = array<i32>} : memref<3x2x128xf32, #tpu.memory_space<vmem>>, vector<1x2x128xf32>,
    %c2_59 = arith.constant 2 : index
    %c0_60 = arith.constant 0 : index
    %c0_61 = arith.constant 0 : index
    %98 = vector.load %arg5[%c2_59, %c0_60, %c0_61] : memref<3x2x128xf32, #tpu.memory_space<vmem>>, vector<1x2x128xf32>
    %99 = vector.shape_cast %98 : vector<1x2x128xf32> to vector<2x128xf32>
    %100 = arith.addf %99, %81 : vector<2x128xf32>
    %c2_62 = arith.constant 2 : index
    %c0_63 = arith.constant 0 : index
    %c0_64 = arith.constant 0 : index
    %101 = vector.load %arg5[%c2_62, %c0_63, %c0_64] : memref<3x2x128xf32, #tpu.memory_space<vmem>>, vector<1x2x128xf32>
    %102 = vector.shape_cast %101 : vector<1x2x128xf32> to vector<2x128xf32>
    %103 = vector.shape_cast %100 : vector<2x128xf32> to vector<1x2x128xf32>
    tpu.vector_store %arg5[%c2_62, %c0_63, %c0_64], %103 {strides = array<i32>} : memref<3x2x128xf32, #tpu.memory_space<vmem>>, vector<1x2x128xf32>,
    return
  }
  func.func @transform_0(%arg0: i32, %arg1: i32, %arg2: memref<4xf32, #tpu.memory_space<smem>>) -> (i32, i32, i32, i32) {
    %c0_i32 = arith.constant 0 : i32
    %c0_i32_0 = arith.constant 0 : i32
    %c0_i32_1 = arith.constant 0 : i32
    return %arg0, %c0_i32, %arg1, %c0_i32_0 : i32, i32, i32, i32
  }
  func.func @transform_1(%arg0: i32, %arg1: i32, %arg2: memref<4xf32, #tpu.memory_space<smem>>) -> (i32, i32, i32, i32) {
    %c0_i32 = arith.constant 0 : i32
    %c0_i32_0 = arith.constant 0 : i32
    %c0_i32_1 = arith.constant 0 : i32
    return %arg0, %c0_i32, %arg1, %c0_i32_0 : i32, i32, i32, i32
  }
  func.func @transform_2(%arg0: i32, %arg1: i32, %arg2: memref<4xf32, #tpu.memory_space<smem>>) -> (i32, i32, i32) {
    %c0_i32 = arith.constant 0 : i32
    %c0_i32_0 = arith.constant 0 : i32
    %c0_i32_1 = arith.constant 0 : i32
    %c0_i32_2 = arith.constant 0 : i32
    return %c0_i32, %c0_i32_0, %c0_i32_1 : i32, i32, i32
  }
}

</mosaic_0001>

<llo_original>
// kernel: tpu_custom_call.1
$region0: #{tpu_custom_call.1}
  #allocation0 [shape = 'u32[]', space=smem, size = 0x4, offset = 0x4, fixed_abs, tag = 'smem constant byte address 0x4 - core index']
  #allocation1 [shape = 'u32[144,128]{1,0:T(1,128)}', space=vmem, size = 0x12000, scoped, tag = 'internal scratch']
  #allocation2 [shape = 's32[1]{0}', space=sflag, size = 0x4, scoped, tag = 'scoped memory for tpu_custom_call.1']
  #allocation3 [shape = 'u8[512]{0}', space=smem, size = 0x200, scoped, tag = 'prefetched SMEM operand 0']
  %s0 = inlined_call_operand.hbm [shape: f32[4], index: 0, kind: input, shape index: {}]
  %s1 = inlined_call_operand.hbm [shape: f32[2,4,2,128], index: 1, kind: input, shape index: {}]
  %s2 = inlined_call_operand.vmem [shape: s32[2,1,2,128], index: 2, kind: input, shape index: {}]
  %s3 = inlined_call_operand.hbm [shape: f32[3,2,128], index: 3, kind: output, shape index: {}]
  %s4 = sld [smem:[#allocation0]]
  $region49: #{tpu_custom_call.1} parent=0
    _
  %s6 = ssub.s32 1, %s4
  %s7 = scalar_select 0, %s6, %s4
  %9 = dma.hbm_to_smem %s0, 16, [#allocation3], [#allocation2]
  %10 = dma.done [#allocation2], 16
  %11 = sfence
  $region1: #{tpu_custom_call.1} parent=0
    #allocation4 [shape = 'u8[8192]{0}', space=vmem, size = 0x2000, scoped, tag = 'input window, operand 1']
    #allocation5 [shape = 's32[2]{0}', space=sflag, size = 0x8, scoped, tag = 'scoped memory for tpu_custom_call.1']
    #allocation6 [shape = 's32[2]{0}', space=sflag, size = 0x8, scoped, tag = 'scoped memory for tpu_custom_call.1']
    #allocation7 [shape = 'u8[3072]{0}', space=vmem, size = 0xc00, scoped, tag = 'output window, operand 0, single buffered']
    %12 = vsyncpa [#allocation5], 0
    %s13 = scalar_lea.sflag [#allocation5], 1
    %14 = vsyncpa %s13, 0
    %15 = vsyncpa [#allocation6], 0
    loop: start=0, step=1, limit=4
    $region2: #{tpu_custom_call.1} parent=1 // loop_pre_header
      _
    $region3: #{tpu_custom_call.1} parent=1 // loop_header
      %s17 = sphi 0, %s21
      %p18 = scmp.ge.s32.totalorder %s17, 4
      %s24 = sphi 0, %s36
      %s25 = sphi 0, %s32
      %s26 = sphi 0, %s24
      %s27 = sphi 0, %s25
      %s28 = sphi 0, %s26
      %s29 = sphi 0, %s27
      %s41 = sphi 0, %s43
      %s44 = sphi 0, %s41
      %s45 = sphi 0, %s44
      %s61 = sphi 0, %s45
      %s69 = sphi 0, %s71
      %s72 = sphi 0, %s69
      %s73 = sphi 0, %s72
      %s89 = sphi 0, %s73
      %s93 = sphi 0, %s93
      %s95 = sphi 0, %s93
      %s96 = sphi 0, %s95
      %s110 = sphi 0, %s96
    $region4: #{tpu_custom_call.1} parent=1 // loop_header_branch
      %20 = sbr.rel (%p18) target = $region8
    $region5: #{tpu_custom_call.1} parent=1 // loop_body
      %s22 = ssub.s32 %s17, 1
      %s23 = ssub.s32 %s17, 2
      %s30 = sadd.s32 1, %s25
      %p31 = scmp.ge.s32.totalorder %s30, 1
      %s32 = scalar_select %p31, 0, %s30
      %s33 = sadd.s32 1, %s24
      %s34 = scalar_select %p31, %s33, %s24
      %p35 = scmp.ge.s32.totalorder %s34, 2
      %s36 = scalar_select %p35, 0, %s34
      %s37 = ssub.s32 %s24, %s36
      %s38 = ssub.s32 %s25, %s32
      %s39 = sor.u32 %s37, %s38
      %p40 = scmp.eq.s32.totalorder %s39, 0
      %s42 = sadd.s32 %s41, 1
      %s43 = scalar_select %p40, %s41, %s42
      %p46 = pneg %p40
      %p47 = scmp.eq.s32.totalorder %s17, 1
      %p48 = por %p46, %p47
      %p49 = scmp.ne.s32.totalorder %s41, %s44
      %p50 = scmp.eq.s32.totalorder %s17, 0
      %p51 = por %p49, %p50
      %p52 = scmp.ne.s32.totalorder %s41, %s44
      %p53 = scmp.eq.s32.totalorder %s22, 1
      %p54 = por %p52, %p53
      %p55 = scmp.ne.s32.totalorder %s44, %s45
      %p56 = scmp.eq.s32.totalorder %s22, 0
      %p57 = por %p55, %p56
      %p58 = scmp.ne.s32.totalorder %s44, %s45
      %p59 = scmp.eq.s32.totalorder %s23, 1
      %p60 = por %p58, %p59
      %p62 = scmp.ne.s32.totalorder %s45, %s61
      %p63 = scmp.eq.s32.totalorder %s23, 0
      %p64 = por %p62, %p63
      %s65 = ssub.s32 %s24, %s36
      %s66 = ssub.s32 %s25, %s32
      %s67 = sor.u32 %s65, %s66
      %p68 = scmp.eq.s32.totalorder %s67, 0
      %s70 = sadd.s32 %s69, 1
      %s71 = scalar_select %p68, %s69, %s70
      %p74 = pneg %p68
      %p75 = scmp.eq.s32.totalorder %s17, 1
      %p76 = por %p74, %p75
      %p77 = scmp.ne.s32.totalorder %s69, %s72
      %p78 = scmp.eq.s32.totalorder %s17, 0
      %p79 = por %p77, %p78
      %p80 = scmp.ne.s32.totalorder %s69, %s72
      %p81 = scmp.eq.s32.totalorder %s22, 1
      %p82 = por %p80, %p81
      %p83 = scmp.ne.s32.totalorder %s72, %s73
      %p84 = scmp.eq.s32.totalorder %s22, 0
      %p85 = por %p83, %p84
      %p86 = scmp.ne.s32.totalorder %s72, %s73
      %p87 = scmp.eq.s32.totalorder %s23, 1
      %p88 = por %p86, %p87
      %p90 = scmp.ne.s32.totalorder %s73, %s89
      %p91 = scmp.eq.s32.totalorder %s23, 0
      %p92 = por %p90, %p91
      %s94 = sadd.s32 %s93, 1
      %p97 = scmp.eq.s32.totalorder %s17, 1
      %p98 = scmp.ne.s32.totalorder %s93, %s95
      %p99 = scmp.eq.s32.totalorder %s17, 0
      %p100 = por %p98, %p99
      %p101 = scmp.ne.s32.totalorder %s93, %s95
      %p102 = scmp.eq.s32.totalorder %s22, 1
      %p103 = por %p101, %p102
      %p104 = scmp.ne.s32.totalorder %s95, %s96
      %p105 = scmp.eq.s32.totalorder %s22, 0
      %p106 = por %p104, %p105
      %p107 = scmp.ne.s32.totalorder %s95, %s96
      %p108 = scmp.eq.s32.totalorder %s23, 1
      %p109 = por %p107, %p108
      %p111 = scmp.ne.s32.totalorder %s96, %s110
      %p112 = scmp.eq.s32.totalorder %s23, 0
      %p113 = por %p111, %p112
      %p114 = scmp.le.s32.totalorder 1, %s17
      %p115 = scmp.lt.s32.totalorder %s17, 3
      %p116 = pnand %p114, %p115
      %p117 = pneg %p116
      // Predicated region
      $region9: #{tpu_custom_call.1} parent=5 // pred_check
        _
      $region10: #{tpu_custom_call.1} parent=5 // pred_check_branch
        %119 = sbr.rel (%p116) target = $region12
      $region11: #{tpu_custom_call.1} parent=5 // pred_region
        %s120 = ssub.s32 %s17, 1
      $region12: #{tpu_custom_call.1} parent=5 // pred_fallthru
        _
      %p121 = scmp.lt.s32.totalorder %s17, 2
      // Predicated region
      $region13: #{tpu_custom_call.1} parent=5 // pred_check
        %p122 = pneg %p121
      $region14: #{tpu_custom_call.1} parent=5 // pred_check_branch
        %124 = sbr.rel (%p122) target = $region16
      $region15: #{tpu_custom_call.1} parent=5 // pred_region
        // Predicated region
        $region17: #{tpu_custom_call.1} parent=15 // pred_check
          %p125 = pneg %p51
        $region18: #{tpu_custom_call.1} parent=15 // pred_check_branch
          %127 = sbr.rel (%p125) target = $region20
        $region19: #{tpu_custom_call.1} parent=15 // pred_region
          %s128 = sand.u32 %s41, 1
          %s129 = scalar_lea.sflag [#allocation5], %s128
          %s130 = sand.u32 %s41, 1
          %s131 = smul.addr %s130, 8
          %s132 = scalar_lea.vmem [#allocation4], %s131
          %s134 = ssub.s32 128, 128
          %135 = vsyncadd %s129, %s134
          %s136 = smul.addr %s24, 4
          %s137 = sadd.s32 %s25, %s136
          %s138 = smul.addr %s137, 32
          %s139 = scalar_lea.hbm %s1, %s138
          %s140 = sshll.u32 %s132, 4
          %s141 = int_to_ptr.vmem [resolvable:$true] %s140
          %146 = dma.hbm_to_vmem [thread:$0]  %s139, 128, %s141, %s129, 32, 32, 2
        $region20: #{tpu_custom_call.1} parent=15 // pred_fallthru
          _
        // Predicated region
        $region21: #{tpu_custom_call.1} parent=15 // pred_check
          %p147 = pneg %p79
        $region22: #{tpu_custom_call.1} parent=15 // pred_check_branch
          %149 = sbr.rel (%p147) target = $region24
        $region23: #{tpu_custom_call.1} parent=15 // pred_region
          %p150 = scmp.lt.s32.totalorder %s24, 1
          %s151 = scalar_select %p150, %s24, 1
          %p152 = scmp.lt.s32.totalorder %s25, 0
          %s153 = scalar_select %p152, %s25, 0
          %s154 = sadd.s32 %s153, %s151
          %s155 = smul.addr %s154, 2
          %s156 = scalar_lea.vmem %s2, %s155
        $region24: #{tpu_custom_call.1} parent=15 // pred_fallthru
          _
      $region16: #{tpu_custom_call.1} parent=5 // pred_fallthru
        _
      %p157 = scmp.le.s32.totalorder 1, %s17
      %p158 = scmp.lt.s32.totalorder %s17, 3
      %p159 = pnand %p157, %p158
      %p160 = pneg %p159
      // Predicated region
      $region25: #{tpu_custom_call.1} parent=5 // pred_check
        _
      $region26: #{tpu_custom_call.1} parent=5 // pred_check_branch
        %162 = sbr.rel (%p159) target = $region28
      $region27: #{tpu_custom_call.1} parent=5 // pred_region
        %s163 = ssub.s32 %s17, 1
        %s164 = sand.u32 %s44, 1
        %s165 = scalar_lea.sflag [#allocation5], %s164
        %s166 = sand.u32 %s44, 1
        %s167 = smul.addr %s166, 8
        %s168 = scalar_lea.vmem [#allocation4], %s167
        // Predicated region
        $region29: #{tpu_custom_call.1} parent=27 // pred_check
          %p169 = pneg %p57
        $region30: #{tpu_custom_call.1} parent=27 // pred_check_branch
          %171 = sbr.rel (%p169) target = $region32
        $region31: #{tpu_custom_call.1} parent=27 // pred_region
          %172 = dma.done %s165, 128
        $region32: #{tpu_custom_call.1} parent=27 // pred_fallthru
          _
        %s173 = sand.u32 %s44, 1
        %s174 = scalar_lea.sflag [#allocation5], %s173
        %s175 = sand.u32 %s44, 1
        %s176 = smul.addr %s175, 8
        %s177 = scalar_lea.vmem [#allocation4], %s176
        %p178 = pneg %p57
        %p179 = pneg %p54
        %p180 = scmp.lt.s32.totalorder %s26, 1
        %s181 = scalar_select %p180, %s26, 1
        %p182 = scmp.lt.s32.totalorder %s27, 0
        %s183 = scalar_select %p182, %s27, 0
        %s184 = sadd.s32 %s183, %s181
        %s185 = smul.addr %s184, 2
        %s186 = scalar_lea.vmem %s2, %s185
        %p187 = pneg %p85
        %p188 = pneg %p82
        %p189 = pneg %p106
        %p190 = pneg %p103
        %p191 = scmp.lt.s32.totalorder %s26, 1
        %s192 = scalar_select %p191, %s26, 1
        %p193 = scmp.lt.s32.totalorder %s27, 0
        %s194 = scalar_select %p193, %s27, 0
        %s195 = sadd.s32 %s194, %s192
        %s196 = smul.addr %s195, 2
        %s197 = scalar_lea.vmem %s2, %s196
        %p198 = scmp.eq.s32.totalorder %s26, 0
        %p199 = scmp.eq.s32.totalorder %s27, 0
        %p200 = pnand %p198, %p199
        %p201 = pneg %p200
        // Predicated region
        $region33: #{tpu_custom_call.1} parent=27 // pred_check
          _
        $region34: #{tpu_custom_call.1} parent=27 // pred_check_branch
          %203 = sbr.rel (%p200) target = $region36
        $region35: #{tpu_custom_call.1} parent=27 // pred_region
          %204 = vst [vmem:[#allocation7] sm:$0x3] 0.0
          %205 = vst [vmem:[#allocation7 + $0x2] sm:$0x3] 0.0
          %206 = vst [vmem:[#allocation7 + $0x4] sm:$0x3] 0.0
        $region36: #{tpu_custom_call.1} parent=27 // pred_fallthru
          _
        %v207 = vld [vmem:[%s197] sm:$0x3]
        %vm208 = vcmp.ge.s32.totalorder %v207, 0
        %v209 = vld [vmem:[%s168] sm:$0x3]
        %s210 = scalar_lea.vmem %s168, 2 [#allocation4]
        %v211 = vld [vmem:[%s210] sm:$0x3]
        %v212 = vmax.f32 %v209, %v211
        %s213 = scalar_lea.vmem %s168, 4 [#allocation4]
        %v214 = vld [vmem:[%s213] sm:$0x3]
        %v215 = vmax.f32 %v212, %v214
        %s216 = scalar_lea.vmem %s168, 6 [#allocation4]
        %v217 = vld [vmem:[%s216] sm:$0x3]
        %v218 = vmax.f32 %v215, %v217
        %v219 = vsub.f32 %v209, %v218
        %v220 = vmul.f32 %v219, 1.442695
        %v221 = vpow.pop %v220
        %v222 = vadd.f32 %v221, 0.0
        %vm223 = vcmp.eq.s32.totalorder %v207, 0
        %v224 = vsel %vm223, %v209, 0.0
        %s225 = sld [smem:[#allocation3]]
        %v226 = vstv %s225
        %v227 = vsel %vm223, %v226, 0.0
        %v228 = vsub.f32 %v211, %v218
        %v229 = vmul.f32 %v228, 1.442695
        %v230 = vpow.pop %v229
        %v231 = vadd.f32 %v222, %v230
        %vm232 = vcmp.eq.s32.totalorder %v207, 1
        %v233 = vsel %vm232, %v211, %v224
        %s234 = sld [smem:[#allocation3 + $0x1]]
        %v235 = vstv %s234
        %v236 = vsel %vm232, %v235, %v227
        %v237 = vsub.f32 %v214, %v218
        %v238 = vmul.f32 %v237, 1.442695
        %v239 = vpow.pop %v238
        %v240 = vadd.f32 %v231, %v239
        %vm241 = vcmp.eq.s32.totalorder %v207, 2
        %v242 = vsel %vm241, %v214, %v233
        %s243 = sld [smem:[#allocation3 + $0x2]]
        %v244 = vstv %s243
        %v245 = vsel %vm241, %v244, %v236
        %v246 = vsub.f32 %v217, %v218
        %v247 = vmul.f32 %v246, 1.442695
        %v248 = vpow.pop %v247
        %v249 = vadd.f32 %v240, %v248
        %vm250 = vcmp.eq.s32.totalorder %v207, 3
        %v251 = vsel %vm250, %v217, %v242
        %s252 = sld [smem:[#allocation3 + $0x3]]
        %v253 = vstv %s252
        %v254 = vsel %vm250, %v253, %v245
        %v255 = vsub.f32 %v251, %v218
        %v256 = vlog2.pop %v249
        %v257 = vmul.f32 %v256, 0.6931472
        %v258 = vsub.f32 %v255, %v257
        %v259 = vmul.f32 %v258, 1.442695
        %v260 = vpow.pop %v259
        %v261 = vsub.f32 1.0, %v260
        %v262 = vmax.f32 %v261, 0.0
        %v263 = vmul.f32 %v262, %v262
        %v264 = vmul.f32 %v263, %v258
        %v265 = vsub.f32 0.0, %v264
        %v266 = vsel %vm208, %v265, 0.0
        %v267 = vsel %vm208, %v254, 0.0
        %v268 = vmul.f32 %v267, %v258
        %v269 = vsub.f32 0.0, %v268
        %v270 = vsel %vm208, %v269, 0.0
        %v271 = vld [vmem:[#allocation7] sm:$0x3]
        %v272 = vadd.f32 %v271, %v266
        %273 = vst [vmem:[#allocation7] sm:$0x3] %v272
        %s274 = scalar_lea.vmem [#allocation7], 2
        %v275 = vld [vmem:[%s274] sm:$0x3]
        %v276 = vadd.f32 %v275, %v270
        %277 = vst [vmem:[%s274] sm:$0x3] %v276
        %s278 = scalar_lea.vmem [#allocation7], 4
        %v279 = vld [vmem:[%s278] sm:$0x3]
        %v280 = vadd.f32 %v279, %v267
        %281 = vst [vmem:[%s278] sm:$0x3] %v280
        // Predicated region
        $region37: #{tpu_custom_call.1} parent=27 // pred_check
          %p282 = pneg %p103
        $region38: #{tpu_custom_call.1} parent=27 // pred_check_branch
          %284 = sbr.rel (%p282) target = $region40
        $region39: #{tpu_custom_call.1} parent=27 // pred_region
          %s286 = ssub.s32 96, 96
          %287 = vsyncadd [#allocation6], %s286
          %s288 = sshll.u32 [#allocation7], 4
          %s289 = int_to_ptr.vmem [resolvable:$true] %s288
          %294 = dma.vmem_to_hbm [thread:$0]  %s289, 96, %s3, [#allocation6], 32, 32, 2
        $region40: #{tpu_custom_call.1} parent=27 // pred_fallthru
          _
        // Predicated region
        $region41: #{tpu_custom_call.1} parent=27 // pred_check
          %p295 = pneg %p103
        $region42: #{tpu_custom_call.1} parent=27 // pred_check_branch
          %297 = sbr.rel (%p295) target = $region44
        $region43: #{tpu_custom_call.1} parent=27 // pred_region
          %298 = dma.done [#allocation6], 96
        $region44: #{tpu_custom_call.1} parent=27 // pred_fallthru
          _
      $region28: #{tpu_custom_call.1} parent=5 // pred_fallthru
        _
      %p299 = scmp.le.s32.totalorder 2, %s17
      // Predicated region
      $region45: #{tpu_custom_call.1} parent=5 // pred_check
        %p300 = pneg %p299
      $region46: #{tpu_custom_call.1} parent=5 // pred_check_branch
        %302 = sbr.rel (%p300) target = $region48
      $region47: #{tpu_custom_call.1} parent=5 // pred_region
        %s303 = ssub.s32 %s17, 2
      $region48: #{tpu_custom_call.1} parent=5 // pred_fallthru
        _
    $region6: #{tpu_custom_call.1} parent=1 // loop_footer
      %s21 = sadd.s32 1, %s17
    $region7: #{tpu_custom_call.1} parent=1 // loop_footer_branch
      %16 = sbr.rel target = $region3
    $region8: #{tpu_custom_call.1} parent=1 // loop_exit
      _
    %304 = vsyncpa [#allocation5], 1
    %s305 = scalar_lea.sflag [#allocation5], 1
    %306 = vsyncpa %s305, 1
    %307 = vsyncpa [#allocation6], 1
    %s308 = scalar_lea.sflag [#allocation6], 1
    %309 = vsyncpa %s308, 1

</llo_original>
